<compile_context>
chip_gen: v7x
topology: tpu7x:2x2x1
jax: 0.10.0
libtpu: 0.0.40
codegen_flags: <defaults>
</compile_context>

<pallas_src>
import functools

import jax
import jax.numpy as jnp
from jax.experimental import pallas as pl
from jax.experimental.pallas import tpu as pltpu

H_ADV1 = 128                  # advantage stream first hidden width
H_COMMON = 64                 # value hidden width == advantage second hidden width
FUSED_IN = H_ADV1 + H_COMMON  # 192: fused first-layer output width
MAX_BLOCK_ROWS = 1024         # batch rows per grid step at production batch sizes


def ddqn_kernel(x_ref, w_in_ref, wa2_ref, wa3_ref, w2v_ref, b_ref,
                out_ref, adv_sum_ref, *, num_actions, batch_total, block_rows):
    p = pl.program_id(0)      # 0: global advantage-sum pass, 1: finalize pass
    b = pl.program_id(1)      # batch block index

    x = x_ref[...]                                                          # (TB, 3)

    # Fused first layer (both streams): lanes 0..127 = adv hidden 1, 128..191 = value hidden.
    # Bias folded as a VPU add (row 0 of b_pack) — no ones-column in the wrapper.
    h1 = jnp.tanh(jnp.dot(x, w_in_ref[...], preferred_element_type=jnp.float32)
                  + b_ref[0:1, :])                                          # (TB, 192)
    ha1 = h1[:, :H_ADV1]                                                    # (TB, 128)
    hv = h1[:, H_ADV1:]                                                     # (TB, 64)

    # Advantage stream: Linear(128,64) -> tanh -> Linear(64,A).
    ha2 = jnp.tanh(jnp.dot(ha1, wa2_ref[...], preferred_element_type=jnp.float32)
                   + b_ref[1:2, :H_COMMON])                                 # (TB, 64)
    adv = (jnp.dot(ha2, wa3_ref[...], preferred_element_type=jnp.float32)
           + b_ref[2:3, :num_actions])                                      # (TB, A)

    # Value head Linear(64,1) as VPU mul + lane reduction (w2v stored as (1, 64)):
    # keeps the tanh'd value hidden off the MXU (exact f32 path).
    val = jnp.sum(hv * w2v_ref[...], axis=1, keepdims=True) + b_ref[3:4, 0:1]  # (TB, 1)

    @pl.when(p == 0)
    def _():
        @pl.when(b == 0)
        def _():
            adv_sum_ref[...] = jnp.zeros_like(adv_sum_ref)
        if batch_total % block_rows != 0:            # static: mask ragged last block
            row = jax.lax.broadcasted_iota(jnp.int32, adv.shape, 0)
            valid = (b * block_rows + row) < batch_total
            adv_blk = jnp.where(valid, adv, 0.0)
        else:
            adv_blk = adv
        adv_sum_ref[...] += jnp.sum(adv_blk, keepdims=True)                 # (1, 1)

    @pl.when(p == 1)
    def _():
        mean_adv = adv_sum_ref[...] * (1.0 / (batch_total * num_actions))   # (1, 1)
        out_ref[...] = (adv + val) - mean_adv                               # (TB, A)


def init_params(key, num_actions):
    """nn.Linear-style U(-1/sqrt(fan_in)) init; weights stored (in, out), biases (1, out)."""
    ks = jax.random.split(key, 10)

    def lin(kw, kb, fan_in, fan_out):
        bound = 1.0 / jnp.sqrt(fan_in)
        w = jax.random.uniform(kw, (fan_in, fan_out), jnp.float32, -bound, bound)
        b = jax.random.uniform(kb, (1, fan_out), jnp.float32, -bound, bound)
        return w, b

    w1v, b1v = lin(ks[0], ks[1], 3, H_COMMON)          # value: 3 -> 64
    w2v, b2v = lin(ks[2], ks[3], H_COMMON, 1)          # value: 64 -> 1
    wa1, ba1 = lin(ks[4], ks[5], 3, H_ADV1)            # adv:   3 -> 128
    wa2, ba2 = lin(ks[6], ks[7], H_ADV1, H_COMMON)     # adv:   128 -> 64
    wa3, ba3 = lin(ks[8], ks[9], H_COMMON, num_actions)  # adv: 64 -> A
    return (w1v, b1v, w2v, b2v, wa1, ba1, wa2, ba2, wa3, ba3)


def pack_params(params, num_actions):
    """Fuse the 10 raw tensors into 5 kernel operands (done once, outside the kernel)."""
    (w1v, b1v, w2v, b2v, wa1, ba1, wa2, ba2, wa3, ba3) = params
    A = num_actions
    # Guard (review item): ba3 must fit in one packed-bias row.
    assert 1 <= A <= FUSED_IN, f"num_actions={A} must be in [1, {FUSED_IN}]"
    assert w1v.shape == (3, H_COMMON) and b1v.shape == (1, H_COMMON)
    assert w2v.shape == (H_COMMON, 1) and b2v.shape == (1, 1)
    assert wa1.shape == (3, H_ADV1) and ba1.shape == (1, H_ADV1)
    assert wa2.shape == (H_ADV1, H_COMMON) and ba2.shape == (1, H_COMMON)
    assert wa3.shape == (H_COMMON, A) and ba3.shape == (1, A)

    # Fused first-layer weight: (3, 192) = [wa1 | w1v].
    w_in = jnp.concatenate([wa1, w1v], axis=1)

    # Value head weight stored transposed (1, 64) for the VPU mul + reduce path.
    w2v_t = w2v.T

    # Packed biases (4, 192):
    #   row 0 = [ba1 | b1v]   row 1 = [ba2 | 0]   row 2 = [ba3 | 0]   row 3 = [b2v | 0]
    b_pack = jnp.zeros((4, FUSED_IN), jnp.float32)
    b_pack = b_pack.at[0, :].set(jnp.concatenate([ba1[0], b1v[0]]))
    b_pack = b_pack.at[1, :H_COMMON].set(ba2[0])
    b_pack = b_pack.at[2, :A].set(ba3[0])
    b_pack = b_pack.at[3, 0].set(b2v[0, 0])

    return w_in, wa2, wa3, w2v_t, b_pack


def linear_ddqn_forward(x, packed_params, num_actions):
    w_in, wa2, wa3, w2v_t, b_pack = packed_params
    B, feat = x.shape
    assert feat == 3
    A = num_actions

    # Batch tiling: whole batch in one block when small; 1024-row blocks otherwise
    # (sized against v7x's 64 MiB VMEM / 32 MiB scoped default: ~1.2 MiB of f32
    # intermediates per 1024-row block).  Ragged last block is masked in-kernel.
    tb = B if B <= MAX_BLOCK_ROWS else MAX_BLOCK_ROWS
    nb = pl.cdiv(B, tb)

    flops_per_row = 2 * (3 * FUSED_IN + H_ADV1 * H_COMMON + H_COMMON * A + H_COMMON)
    cost = pl.CostEstimate(
        flops=2 * B * flops_per_row,                       # two passes over the batch
        transcendentals=2 * B * (FUSED_IN + H_COMMON),
        bytes_accessed=4 * (2 * x.size + w_in.size + wa2.size + wa3.size
                            + w2v_t.size + b_pack.size + B * A),
    )

    return pl.pallas_call(
        functools.partial(ddqn_kernel, num_actions=A, batch_total=B, block_rows=tb),
        out_shape=jax.ShapeDtypeStruct((B, A), jnp.float32),
        grid=(2, nb),                                       # (pass, batch block)
        in_specs=[
            pl.BlockSpec((tb, 3), lambda p, b: (b, 0)),            # x: batch-blocked
            pl.BlockSpec((3, FUSED_IN), lambda p, b: (0, 0)),      # weights: resident
            pl.BlockSpec((H_ADV1, H_COMMON), lambda p, b: (0, 0)),
            pl.BlockSpec((H_COMMON, A), lambda p, b: (0, 0)),
            pl.BlockSpec((1, H_COMMON), lambda p, b: (0, 0)),
            pl.BlockSpec((4, FUSED_IN), lambda p, b: (0, 0)),
        ],
        # Pass 0 maps every step to output block 0, so the (unwritten) output buffer
        # is never flushed early; pass 1 writes each (tb, A) block exactly once.
        out_specs=pl.BlockSpec((tb, A), lambda p, b: (b * p, 0)),
        scratch_shapes=[pltpu.VMEM((1, 1), jnp.float32)],          # global advantage sum
        compiler_params=pltpu.CompilerParams(
            dimension_semantics=("arbitrary", "arbitrary"),        # pass 1 needs pass 0
            vmem_limit_bytes=32 * 1024 * 1024,
        ),
        cost_estimate=cost,
    )(x.astype(jnp.float32), w_in, wa2, wa3, w2v_t, b_pack)


def reference_forward(x, params):
    (w1v, b1v, w2v, b2v, wa1, ba1, wa2, ba2, wa3, ba3) = params
    value = jnp.tanh(x @ w1v + b1v) @ w2v + b2v
    h = jnp.tanh(x @ wa1 + ba1)
    h = jnp.tanh(h @ wa2 + ba2)
    adv = h @ wa3 + ba3
    return value + adv - jnp.mean(adv)


if __name__ == "__main__":
    key = jax.random.PRNGKey(0)
    k_x, k_p, k_x2 = jax.random.split(key, 3)

    num_actions = 4
    params = init_params(k_p, num_actions)
    packed = pack_params(params, num_actions)

    # Small RL-inference-style batch (single block).
    batch = 8
    x = jax.random.normal(k_x, (batch, 3), jnp.float32)
    out = jax.block_until_ready(linear_ddqn_forward(x, packed, num_actions))
    ref = reference_forward(x, params)
    assert out.shape == (batch, num_actions)
    assert jnp.allclose(out, ref, atol=2e-4, rtol=2e-4), (out, ref)

    # Multi-block batch exercising the two-pass global-mean path (2 x 1024-row blocks).
    batch2 = 2048
    x2 = jax.random.normal(k_x2, (batch2, 3), jnp.float32)
    out2 = jax.block_until_ready(linear_ddqn_forward(x2, packed, num_actions))
    ref2 = reference_forward(x2, params)
    assert out2.shape == (batch2, num_actions)
    assert jnp.allclose(out2, ref2, atol=2e-4, rtol=2e-4)

    print("KERNEL_OK")
</pallas_src>

<mosaic_0001>
module attributes {stable_mosaic.version = 11 : i64} {
  func.func @ddqn_kernel(%arg0: i32, %arg1: i32, %arg2: memref<8x3xf32, #tpu.memory_space<vmem>>, %arg3: memref<3x192xf32, #tpu.memory_space<vmem>>, %arg4: memref<128x64xf32, #tpu.memory_space<vmem>>, %arg5: memref<64x4xf32, #tpu.memory_space<vmem>>, %arg6: memref<1x64xf32, #tpu.memory_space<vmem>>, %arg7: memref<4x192xf32, #tpu.memory_space<vmem>>, %arg8: memref<8x4xf32, #tpu.memory_space<vmem>>, %arg9: memref<1x1xf32, #tpu.memory_space<vmem>>) attributes {dimension_semantics = [#tpu.dimension_semantics<arbitrary>, #tpu.dimension_semantics<arbitrary>], iteration_bounds = array<i64: 2, 1>, scalar_prefetch = 0 : i64, scratch_operands = 1 : i64, tpu.core_type = #tpu.core_type<tc>, window_params = [{transform_indices = @transform_0, window_bounds = array<i64: 8, 3>}, {pipeline_mode = #tpu.pipeline_mode<synchronous>, transform_indices = @transform_1, window_bounds = array<i64: 3, 192>}, {pipeline_mode = #tpu.pipeline_mode<synchronous>, transform_indices = @transform_2, window_bounds = array<i64: 128, 64>}, {pipeline_mode = #tpu.pipeline_mode<synchronous>, transform_indices = @transform_3, window_bounds = array<i64: 64, 4>}, {pipeline_mode = #tpu.pipeline_mode<synchronous>, transform_indices = @transform_4, window_bounds = array<i64: 1, 64>}, {pipeline_mode = #tpu.pipeline_mode<synchronous>, transform_indices = @transform_5, window_bounds = array<i64: 4, 192>}, {transform_indices = @transform_6, window_bounds = array<i64: 8, 4>}]} {
    %c0 = arith.constant 0 : index
    %c0_0 = arith.constant 0 : index
    %0 = vector.load %arg2[%c0, %c0_0] : memref<8x3xf32, #tpu.memory_space<vmem>>, vector<8x3xf32>
    %c0_1 = arith.constant 0 : index
    %c0_2 = arith.constant 0 : index
    %1 = vector.load %arg3[%c0_1, %c0_2] : memref<3x192xf32, #tpu.memory_space<vmem>>, vector<3x192xf32>
    %cst = arith.constant dense<0.000000e+00> : vector<8x192xf32>
    %2 = tpu.matmul %0, %1, %cst {dimension_numbers = #tpu.dot_dimension_numbers<[1], [0], [0], [1], [0, 0, 1, 1], [], []>} : vector<8x3xf32>, vector<3x192xf32>, vector<8x192xf32> -> vector<8x192xf32>
    %c0_3 = arith.constant 0 : index
    %c0_4 = arith.constant 0 : index
    %3 = vector.load %arg7[%c0_3, %c0_4] : memref<4x192xf32, #tpu.memory_space<vmem>>, vector<1x192xf32>
    %4 = vector.broadcast %3 : vector<1x192xf32> to vector<8x192xf32>
    %5 = arith.addf %2, %4 : vector<8x192xf32>
    %6 = math.tanh %5 : vector<8x192xf32>
    %7 = vector.extract_strided_slice %6 {offsets = [0, 0], sizes = [8, 128], strides = [1, 1]} : vector<8x192xf32> to vector<8x128xf32>
    %8 = vector.extract_strided_slice %6 {offsets = [0, 128], sizes = [8, 64], strides = [1, 1]} : vector<8x192xf32> to vector<8x64xf32>
    %c0_5 = arith.constant 0 : index
    %c0_6 = arith.constant 0 : index
    %9 = vector.load %arg4[%c0_5, %c0_6] : memref<128x64xf32, #tpu.memory_space<vmem>>, vector<128x64xf32>
    %cst_7 = arith.constant dense<0.000000e+00> : vector<8x64xf32>
    %10 = tpu.matmul %7, %9, %cst_7 {dimension_numbers = #tpu.dot_dimension_numbers<[1], [0], [0], [1], [0, 0, 1, 1], [], []>} : vector<8x128xf32>, vector<128x64xf32>, vector<8x64xf32> -> vector<8x64xf32>
    %c1 = arith.constant 1 : index
    %c0_8 = arith.constant 0 : index
    %11 = vector.load %arg7[%c1, %c0_8] : memref<4x192xf32, #tpu.memory_space<vmem>>, vector<1x64xf32>
    %12 = vector.broadcast %11 : vector<1x64xf32> to vector<8x64xf32>
    %13 = arith.addf %10, %12 : vector<8x64xf32>
    %14 = math.tanh %13 : vector<8x64xf32>
    %c0_9 = arith.constant 0 : index
    %c0_10 = arith.constant 0 : index
    %15 = vector.load %arg5[%c0_9, %c0_10] : memref<64x4xf32, #tpu.memory_space<vmem>>, vector<64x4xf32>
    %cst_11 = arith.constant dense<0.000000e+00> : vector<8x4xf32>
    %16 = tpu.matmul %14, %15, %cst_11 {dimension_numbers = #tpu.dot_dimension_numbers<[1], [0], [0], [1], [0, 0, 1, 1], [], []>} : vector<8x64xf32>, vector<64x4xf32>, vector<8x4xf32> -> vector<8x4xf32>
    %c2 = arith.constant 2 : index
    %c0_12 = arith.constant 0 : index
    %17 = vector.load %arg7[%c2, %c0_12] : memref<4x192xf32, #tpu.memory_space<vmem>>, vector<1x4xf32>
    %18 = vector.broadcast %17 : vector<1x4xf32> to vector<8x4xf32>
    %19 = arith.addf %16, %18 : vector<8x4xf32>
    %c0_13 = arith.constant 0 : index
    %c0_14 = arith.constant 0 : index
    %20 = vector.load %arg6[%c0_13, %c0_14] : memref<1x64xf32, #tpu.memory_space<vmem>>, vector<1x64xf32>
    %21 = vector.broadcast %20 : vector<1x64xf32> to vector<8x64xf32>
    %22 = arith.mulf %8, %21 : vector<8x64xf32>
    %cst_15 = arith.constant dense<0.000000e+00> : vector<8xf32>
    %23 = vector.multi_reduction <add>, %22, %cst_15 [1] : vector<8x64xf32> to vector<8xf32>
    %24 = vector.shape_cast %23 : vector<8xf32> to vector<8x1xf32>
    %c3 = arith.constant 3 : index
    %c0_16 = arith.constant 0 : index
    %25 = vector.load %arg7[%c3, %c0_16] : memref<4x192xf32, #tpu.memory_space<vmem>>, vector<1x1xf32>
    %26 = vector.broadcast %25 : vector<1x1xf32> to vector<8x1xf32>
    %27 = arith.addf %24, %26 : vector<8x1xf32>
    %c0_i32 = arith.constant 0 : i32
    %28 = arith.cmpi eq, %arg0, %c0_i32 : i32
    %29 = arith.extui %28 : i1 to i32
    %c0_i32_17 = arith.constant 0 : i32
    %30 = arith.cmpi ne, %29, %c0_i32_17 : i32
    scf.if %30 {
      %c0_i32_19 = arith.constant 0 : i32
      %34 = arith.cmpi eq, %arg1, %c0_i32_19 : i32
      %35 = arith.extui %34 : i1 to i32
      %c0_i32_20 = arith.constant 0 : i32
      %36 = arith.cmpi ne, %35, %c0_i32_20 : i32
      scf.if %36 {
        %cst_26 = arith.constant 0.000000e+00 : f32
        %45 = vector.broadcast %cst_26 : f32 to vector<1x1xf32>
        %c0_27 = arith.constant 0 : index
        %c0_28 = arith.constant 0 : index
        %46 = vector.load %arg9[%c0_27, %c0_28] : memref<1x1xf32, #tpu.memory_space<vmem>>, vector<1x1xf32>
        tpu.vector_store %arg9[%c0_27, %c0_28], %45 {strides = array<i32>} : memref<1x1xf32, #tpu.memory_space<vmem>>, vector<1x1xf32>,
      } else {
      }
      %c0_21 = arith.constant 0 : index
      %c0_22 = arith.constant 0 : index
      %37 = vector.load %arg9[%c0_21, %c0_22] : memref<1x1xf32, #tpu.memory_space<vmem>>, vector<1x1xf32>
      %38 = vector.shape_cast %19 : vector<8x4xf32> to vector<1x8x4xf32>
      %cst_23 = arith.constant dense<0.000000e+00> : vector<1xf32>
      %39 = vector.multi_reduction <add>, %38, %cst_23 [1, 2] : vector<1x8x4xf32> to vector<1xf32>
      %40 = vector.shape_cast %39 : vector<1xf32> to vector<1x1x1xf32>
      %41 = vector.extract %40[0, 0, 0] : f32 from vector<1x1x1xf32>
      %42 = vector.broadcast %41 : f32 to vector<1x1xf32>
      %43 = arith.addf %37, %42 : vector<1x1xf32>
      %c0_24 = arith.constant 0 : index
      %c0_25 = arith.constant 0 : index
      %44 = vector.load %arg9[%c0_24, %c0_25] : memref<1x1xf32, #tpu.memory_space<vmem>>, vector<1x1xf32>
      tpu.vector_store %arg9[%c0_24, %c0_25], %43 {strides = array<i32>} : memref<1x1xf32, #tpu.memory_space<vmem>>, vector<1x1xf32>,
    } else {
    }
    %c1_i32 = arith.constant 1 : i32
    %31 = arith.cmpi eq, %arg0, %c1_i32 : i32
    %32 = arith.extui %31 : i1 to i32
    %c0_i32_18 = arith.constant 0 : i32
    %33 = arith.cmpi ne, %32, %c0_i32_18 : i32
    scf.if %33 {
      %c0_19 = arith.constant 0 : index
      %c0_20 = arith.constant 0 : index
      %34 = vector.load %arg9[%c0_19, %c0_20] : memref<1x1xf32, #tpu.memory_space<vmem>>, vector<1x1xf32>
      %cst_21 = arith.constant 3.125000e-02 : f32
      %35 = vector.broadcast %cst_21 : f32 to vector<1x1xf32>
      %36 = arith.mulf %34, %35 : vector<1x1xf32>
      %37 = vector.broadcast %27 : vector<8x1xf32> to vector<8x4xf32>
      %38 = arith.addf %19, %37 : vector<8x4xf32>
      %39 = vector.broadcast %36 : vector<1x1xf32> to vector<8x4xf32>
      %40 = arith.subf %38, %39 : vector<8x4xf32>
      %c0_22 = arith.constant 0 : index
      %c0_23 = arith.constant 0 : index
      %41 = vector.load %arg8[%c0_22, %c0_23] : memref<8x4xf32, #tpu.memory_space<vmem>>, vector<8x4xf32>
      tpu.vector_store %arg8[%c0_22, %c0_23], %40 {strides = array<i32>} : memref<8x4xf32, #tpu.memory_space<vmem>>, vector<8x4xf32>,
    } else {
    }
    return
  }
  func.func @transform_0(%arg0: i32, %arg1: i32) -> (i32, i32) {
    %c0_i32 = arith.constant 0 : i32
    %c0_i32_0 = arith.constant 0 : i32
    return %arg1, %c0_i32 : i32, i32
  }
  func.func @transform_1(%arg0: i32, %arg1: i32) -> (i32, i32) {
    %c0_i32 = arith.constant 0 : i32
    %c0_i32_0 = arith.constant 0 : i32
    %c0_i32_1 = arith.constant 0 : i32
    return %c0_i32, %c0_i32_0 : i32, i32
  }
  func.func @transform_2(%arg0: i32, %arg1: i32) -> (i32, i32) {
    %c0_i32 = arith.constant 0 : i32
    %c0_i32_0 = arith.constant 0 : i32
    %c0_i32_1 = arith.constant 0 : i32
    return %c0_i32, %c0_i32_0 : i32, i32
  }
  func.func @transform_3(%arg0: i32, %arg1: i32) -> (i32, i32) {
    %c0_i32 = arith.constant 0 : i32
    %c0_i32_0 = arith.constant 0 : i32
    %c0_i32_1 = arith.constant 0 : i32
    return %c0_i32, %c0_i32_0 : i32, i32
  }
  func.func @transform_4(%arg0: i32, %arg1: i32) -> (i32, i32) {
    %c0_i32 = arith.constant 0 : i32
    %c0_i32_0 = arith.constant 0 : i32
    %c0_i32_1 = arith.constant 0 : i32
    return %c0_i32, %c0_i32_0 : i32, i32
  }
  func.func @transform_5(%arg0: i32, %arg1: i32) -> (i32, i32) {
    %c0_i32 = arith.constant 0 : i32
    %c0_i32_0 = arith.constant 0 : i32
    %c0_i32_1 = arith.constant 0 : i32
    return %c0_i32, %c0_i32_0 : i32, i32
  }
  func.func @transform_6(%arg0: i32, %arg1: i32) -> (i32, i32) {
    %0 = arith.muli %arg1, %arg0 : i32
    %c0_i32 = arith.constant 0 : i32
    %c0_i32_0 = arith.constant 0 : i32
    return %0, %c0_i32 : i32, i32
  }
}

</mosaic_0001>

<llo_original>
// kernel: tpu_custom_call.1
$region0: #{tpu_custom_call.1}
  #allocation0 [shape = 'u32[]', space=smem, size = 0x4, offset = 0x4, fixed_abs, tag = 'smem constant byte address 0x4 - core index']
  #allocation1 [shape = 'u32[144,128]{1,0:T(1,128)}', space=vmem, size = 0x12000, scoped, tag = 'internal scratch']
  #allocation2 [shape = 'f32[1,1]{1,0:T(1,128)}', space=vmem, size = 0x200, scoped, tag = 'scratch operand']
  %s0 = inlined_call_operand.vmem [shape: f32[8,3], index: 0, kind: input, shape index: {}]
  %s1 = inlined_call_operand.vmem [shape: f32[3,192], index: 1, kind: input, shape index: {}]
  %s2 = inlined_call_operand.vmem [shape: f32[128,64], index: 2, kind: input, shape index: {}]
  %s3 = inlined_call_operand.vmem [shape: f32[64,4], index: 3, kind: input, shape index: {}]
  %s4 = inlined_call_operand.vmem [shape: f32[1,64], index: 4, kind: input, shape index: {}]
  %s5 = inlined_call_operand.vmem [shape: f32[4,192], index: 5, kind: input, shape index: {}]
  %s6 = inlined_call_operand.vmem [shape: f32[8,4], index: 6, kind: output, shape index: {}]
  %s7 = sld [smem:[#allocation0]]
  $region69: #{tpu_custom_call.1} parent=0
    _
  %s9 = ssub.s32 1, %s7
  %s10 = scalar_select 0, %s9, %s7
  loop: start=0, step=1, limit=4
  $region2: #{tpu_custom_call.1} parent=0 // loop_pre_header
    _
  $region3: #{tpu_custom_call.1} parent=0 // loop_header
    %s12 = sphi 0, %s16
    %p13 = scmp.ge.s32.totalorder %s12, 4
    %s19 = sphi 0, %s31
    %s20 = sphi 0, %s27
    %s21 = sphi 0, %s19
    %s22 = sphi 0, %s20
    %s23 = sphi 0, %s21
    %s24 = sphi 0, %s22
    %s34 = sphi 0, %s36
    %s37 = sphi 0, %s34
    %s38 = sphi 0, %s37
    %s54 = sphi 0, %s38
    %s58 = sphi 0, %s58
    %s60 = sphi 0, %s58
    %s61 = sphi 0, %s60
    %s75 = sphi 0, %s61
    %s79 = sphi 0, %s79
    %s81 = sphi 0, %s79
    %s82 = sphi 0, %s81
    %s96 = sphi 0, %s82
    %s100 = sphi 0, %s100
    %s102 = sphi 0, %s100
    %s103 = sphi 0, %s102
    %s117 = sphi 0, %s103
    %s121 = sphi 0, %s121
    %s123 = sphi 0, %s121
    %s124 = sphi 0, %s123
    %s138 = sphi 0, %s124
    %s142 = sphi 0, %s142
    %s144 = sphi 0, %s142
    %s145 = sphi 0, %s144
    %s159 = sphi 0, %s145
    %s167 = sphi 0, %s169
    %s170 = sphi 0, %s167
    %s171 = sphi 0, %s170
    %s187 = sphi 0, %s171
  $region4: #{tpu_custom_call.1} parent=0 // loop_header_branch
    %15 = sbr.rel (%p13) target = $region8
  $region5: #{tpu_custom_call.1} parent=0 // loop_body
    %s17 = ssub.s32 %s12, 1
    %s18 = ssub.s32 %s12, 2
    %s25 = sadd.s32 1, %s20
    %p26 = scmp.ge.s32.totalorder %s25, 1
    %s27 = scalar_select %p26, 0, %s25
    %s28 = sadd.s32 1, %s19
    %s29 = scalar_select %p26, %s28, %s19
    %p30 = scmp.ge.s32.totalorder %s29, 2
    %s31 = scalar_select %p30, 0, %s29
    %s32 = ssub.s32 %s20, %s27
    %p33 = scmp.eq.s32.totalorder %s32, 0
    %s35 = sadd.s32 %s34, 1
    %s36 = scalar_select %p33, %s34, %s35
    %p39 = pneg %p33
    %p40 = scmp.eq.s32.totalorder %s12, 1
    %p41 = por %p39, %p40
    %p42 = scmp.ne.s32.totalorder %s34, %s37
    %p43 = scmp.eq.s32.totalorder %s12, 0
    %p44 = por %p42, %p43
    %p45 = scmp.ne.s32.totalorder %s34, %s37
    %p46 = scmp.eq.s32.totalorder %s17, 1
    %p47 = por %p45, %p46
    %p48 = scmp.ne.s32.totalorder %s37, %s38
    %p49 = scmp.eq.s32.totalorder %s17, 0
    %p50 = por %p48, %p49
    %p51 = scmp.ne.s32.totalorder %s37, %s38
    %p52 = scmp.eq.s32.totalorder %s18, 1
    %p53 = por %p51, %p52
    %p55 = scmp.ne.s32.totalorder %s38, %s54
    %p56 = scmp.eq.s32.totalorder %s18, 0
    %p57 = por %p55, %p56
    %s59 = sadd.s32 %s58, 1
    %p62 = scmp.eq.s32.totalorder %s12, 1
    %p63 = scmp.ne.s32.totalorder %s58, %s60
    %p64 = scmp.eq.s32.totalorder %s12, 0
    %p65 = por %p63, %p64
    %p66 = scmp.ne.s32.totalorder %s58, %s60
    %p67 = scmp.eq.s32.totalorder %s17, 1
    %p68 = por %p66, %p67
    %p69 = scmp.ne.s32.totalorder %s60, %s61
    %p70 = scmp.eq.s32.totalorder %s17, 0
    %p71 = por %p69, %p70
    %p72 = scmp.ne.s32.totalorder %s60, %s61
    %p73 = scmp.eq.s32.totalorder %s18, 1
    %p74 = por %p72, %p73
    %p76 = scmp.ne.s32.totalorder %s61, %s75
    %p77 = scmp.eq.s32.totalorder %s18, 0
    %p78 = por %p76, %p77
    %s80 = sadd.s32 %s79, 1
    %p83 = scmp.eq.s32.totalorder %s12, 1
    %p84 = scmp.ne.s32.totalorder %s79, %s81
    %p85 = scmp.eq.s32.totalorder %s12, 0
    %p86 = por %p84, %p85
    %p87 = scmp.ne.s32.totalorder %s79, %s81
    %p88 = scmp.eq.s32.totalorder %s17, 1
    %p89 = por %p87, %p88
    %p90 = scmp.ne.s32.totalorder %s81, %s82
    %p91 = scmp.eq.s32.totalorder %s17, 0
    %p92 = por %p90, %p91
    %p93 = scmp.ne.s32.totalorder %s81, %s82
    %p94 = scmp.eq.s32.totalorder %s18, 1
    %p95 = por %p93, %p94
    %p97 = scmp.ne.s32.totalorder %s82, %s96
    %p98 = scmp.eq.s32.totalorder %s18, 0
    %p99 = por %p97, %p98
    %s101 = sadd.s32 %s100, 1
    %p104 = scmp.eq.s32.totalorder %s12, 1
    %p105 = scmp.ne.s32.totalorder %s100, %s102
    %p106 = scmp.eq.s32.totalorder %s12, 0
    %p107 = por %p105, %p106
    %p108 = scmp.ne.s32.totalorder %s100, %s102
    %p109 = scmp.eq.s32.totalorder %s17, 1
    %p110 = por %p108, %p109
    %p111 = scmp.ne.s32.totalorder %s102, %s103
    %p112 = scmp.eq.s32.totalorder %s17, 0
    %p113 = por %p111, %p112
    %p114 = scmp.ne.s32.totalorder %s102, %s103
    %p115 = scmp.eq.s32.totalorder %s18, 1
    %p116 = por %p114, %p115
    %p118 = scmp.ne.s32.totalorder %s103, %s117
    %p119 = scmp.eq.s32.totalorder %s18, 0
    %p120 = por %p118, %p119
    %s122 = sadd.s32 %s121, 1
    %p125 = scmp.eq.s32.totalorder %s12, 1
    %p126 = scmp.ne.s32.totalorder %s121, %s123
    %p127 = scmp.eq.s32.totalorder %s12, 0
    %p128 = por %p126, %p127
    %p129 = scmp.ne.s32.totalorder %s121, %s123
    %p130 = scmp.eq.s32.totalorder %s17, 1
    %p131 = por %p129, %p130
    %p132 = scmp.ne.s32.totalorder %s123, %s124
    %p133 = scmp.eq.s32.totalorder %s17, 0
    %p134 = por %p132, %p133
    %p135 = scmp.ne.s32.totalorder %s123, %s124
    %p136 = scmp.eq.s32.totalorder %s18, 1
    %p137 = por %p135, %p136
    %p139 = scmp.ne.s32.totalorder %s124, %s138
    %p140 = scmp.eq.s32.totalorder %s18, 0
    %p141 = por %p139, %p140
    %s143 = sadd.s32 %s142, 1
    %p146 = scmp.eq.s32.totalorder %s12, 1
    %p147 = scmp.ne.s32.totalorder %s142, %s144
    %p148 = scmp.eq.s32.totalorder %s12, 0
    %p149 = por %p147, %p148
    %p150 = scmp.ne.s32.totalorder %s142, %s144
    %p151 = scmp.eq.s32.totalorder %s17, 1
    %p152 = por %p150, %p151
    %p153 = scmp.ne.s32.totalorder %s144, %s145
    %p154 = scmp.eq.s32.totalorder %s17, 0
    %p155 = por %p153, %p154
    %p156 = scmp.ne.s32.totalorder %s144, %s145
    %p157 = scmp.eq.s32.totalorder %s18, 1
    %p158 = por %p156, %p157
    %p160 = scmp.ne.s32.totalorder %s145, %s159
    %p161 = scmp.eq.s32.totalorder %s18, 0
    %p162 = por %p160, %p161
    %s163 = smul.u32 %s20, %s19
    %s164 = smul.u32 %s27, %s31
    %s165 = ssub.s32 %s163, %s164
    %p166 = scmp.eq.s32.totalorder %s165, 0
    %s168 = sadd.s32 %s167, 1
    %s169 = scalar_select %p166, %s167, %s168
    %p172 = pneg %p166
    %p173 = scmp.eq.s32.totalorder %s12, 1
    %p174 = por %p172, %p173
    %p175 = scmp.ne.s32.totalorder %s167, %s170
    %p176 = scmp.eq.s32.totalorder %s12, 0
    %p177 = por %p175, %p176
    %p178 = scmp.ne.s32.totalorder %s167, %s170
    %p179 = scmp.eq.s32.totalorder %s17, 1
    %p180 = por %p178, %p179
    %p181 = scmp.ne.s32.totalorder %s170, %s171
    %p182 = scmp.eq.s32.totalorder %s17, 0
    %p183 = por %p181, %p182
    %p184 = scmp.ne.s32.totalorder %s170, %s171
    %p185 = scmp.eq.s32.totalorder %s18, 1
    %p186 = por %p184, %p185
    %p188 = scmp.ne.s32.totalorder %s171, %s187
    %p189 = scmp.eq.s32.totalorder %s18, 0
    %p190 = por %p188, %p189
    %p191 = scmp.le.s32.totalorder 1, %s12
    %p192 = scmp.lt.s32.totalorder %s12, 3
    %p193 = pnand %p191, %p192
    %p194 = pneg %p193
    // Predicated region
    $region9: #{tpu_custom_call.1} parent=5 // pred_check
      _
    $region10: #{tpu_custom_call.1} parent=5 // pred_check_branch
      %196 = sbr.rel (%p193) target = $region12
    $region11: #{tpu_custom_call.1} parent=5 // pred_region
      %s197 = ssub.s32 %s12, 1
      // Predicated region
      $region13: #{tpu_custom_call.1} parent=11 // pred_check
        %p198 = pneg %p50
      $region14: #{tpu_custom_call.1} parent=11 // pred_check_branch
        %200 = sbr.rel (%p198) target = $region16
      $region15: #{tpu_custom_call.1} parent=11 // pred_region
        %p201 = scmp.lt.s32.totalorder %s22, 0
        %s202 = scalar_select %p201, %s22, 0
        %s203 = smul.addr %s202, 8
        %s204 = scalar_lea.vmem %s0, %s203
      $region16: #{tpu_custom_call.1} parent=11 // pred_fallthru
        _
      // Predicated region
      $region17: #{tpu_custom_call.1} parent=11 // pred_check
        %p205 = pneg %p71
      $region18: #{tpu_custom_call.1} parent=11 // pred_check_branch
        %207 = sbr.rel (%p205) target = $region20
      $region19: #{tpu_custom_call.1} parent=11 // pred_region
        _
      $region20: #{tpu_custom_call.1} parent=11 // pred_fallthru
        _
      // Predicated region
      $region21: #{tpu_custom_call.1} parent=11 // pred_check
        %p208 = pneg %p92
      $region22: #{tpu_custom_call.1} parent=11 // pred_check_branch
        %210 = sbr.rel (%p208) target = $region24
      $region23: #{tpu_custom_call.1} parent=11 // pred_region
        _
      $region24: #{tpu_custom_call.1} parent=11 // pred_fallthru
        _
      // Predicated region
      $region25: #{tpu_custom_call.1} parent=11 // pred_check
        %p211 = pneg %p113
      $region26: #{tpu_custom_call.1} parent=11 // pred_check_branch
        %213 = sbr.rel (%p211) target = $region28
      $region27: #{tpu_custom_call.1} parent=11 // pred_region
        _
      $region28: #{tpu_custom_call.1} parent=11 // pred_fallthru
        _
      // Predicated region
      $region29: #{tpu_custom_call.1} parent=11 // pred_check
        %p214 = pneg %p134
      $region30: #{tpu_custom_call.1} parent=11 // pred_check_branch
        %216 = sbr.rel (%p214) target = $region32
      $region31: #{tpu_custom_call.1} parent=11 // pred_region
        _
      $region32: #{tpu_custom_call.1} parent=11 // pred_fallthru
        _
      // Predicated region
      $region33: #{tpu_custom_call.1} parent=11 // pred_check
        %p217 = pneg %p155
      $region34: #{tpu_custom_call.1} parent=11 // pred_check_branch
        %219 = sbr.rel (%p217) target = $region36
      $region35: #{tpu_custom_call.1} parent=11 // pred_region
        _
      $region36: #{tpu_custom_call.1} parent=11 // pred_fallthru
        _
    $region12: #{tpu_custom_call.1} parent=5 // pred_fallthru
      _
    %p220 = scmp.lt.s32.totalorder %s12, 2
    // Predicated region
    $region37: #{tpu_custom_call.1} parent=5 // pred_check
      %p221 = pneg %p220
    $region38: #{tpu_custom_call.1} parent=5 // pred_check_branch
      %223 = sbr.rel (%p221) target = $region40
    $region39: #{tpu_custom_call.1} parent=5 // pred_region
      _
    $region40: #{tpu_custom_call.1} parent=5 // pred_fallthru
      _
    %p224 = scmp.le.s32.totalorder 1, %s12
    %p225 = scmp.lt.s32.totalorder %s12, 3
    %p226 = pnand %p224, %p225
    %p227 = pneg %p226
    // Predicated region
    $region41: #{tpu_custom_call.1} parent=5 // pred_check
      _
    $region42: #{tpu_custom_call.1} parent=5 // pred_check_branch
      %229 = sbr.rel (%p226) target = $region44
    $region43: #{tpu_custom_call.1} parent=5 // pred_region
      %s230 = ssub.s32 %s12, 1
      %p231 = scmp.lt.s32.totalorder %s22, 0
      %s232 = scalar_select %p231, %s22, 0
      %s233 = smul.addr %s232, 8
      %s234 = scalar_lea.vmem %s0, %s233
      %p235 = pneg %p50
      %p236 = pneg %p47
      %p237 = pneg %p71
      %p238 = pneg %p68
      %p239 = pneg %p92
      %p240 = pneg %p89
      %p241 = pneg %p113
      %p242 = pneg %p110
      %p243 = pneg %p134
      %p244 = pneg %p131
      %p245 = pneg %p155
      %p246 = pneg %p152
      %p247 = pneg %p183
      %p248 = pneg %p180
      %s249 = smul.u32 %s22, %s21
      %p250 = scmp.lt.s32.totalorder %s249, 0
      %s251 = scalar_select %p250, %s249, 0
      %s252 = smul.addr %s251, 8
      %s253 = scalar_lea.vmem %s6, %s252
      %p254 = scmp.lt.s32.totalorder %s22, 0
      %s255 = scalar_select %p254, %s22, 0
      %s256 = smul.addr %s255, 8
      %s257 = scalar_lea.vmem %s0, %s256
      %s258 = smul.u32 %s22, %s21
      %p259 = scmp.lt.s32.totalorder %s258, 0
      %s260 = scalar_select %p259, %s258, 0
      %s261 = smul.addr %s260, 8
      %s262 = scalar_lea.vmem %s6, %s261
      %s263 = smul.u32 %s22, %s21
      %v264 = vld [vmem:[%s257] sm:$0xff]
      %v265 = vld [vmem:[%s1] sm:$0x77]
      %v266 = vld [vmem:[%s5] ss:$4 sm:$0x3]
      %v268 = vlaneseq
      %v269 = vshrl.u32 %v268, 7
      %v270 = vsub.s32 0, %v269
      %v271 = vrot.slane %v266, %v270
      %v272 = vlaneseq
      %v273 = vshrl.u32 %v272, 7
      %v274 = vsub.s32 1, %v273
      %v275 = vrot.slane %v266, %v274
      %v279 = vcombine.high %v265, %v265
      %vm280 = vcmask 23552
      %v282 = vsel %vm280, %v264, 0
      %vm284 = vcmask 1042432
      %v285 = vsel %vm284, %v265, 0
      %v287 = vsel %vm284, %v279, 0
      %289 = vmatprep.subr.mxu0 %v287
      %290 = vmatpush1.msra.mxu0 %v285
      %291 = vmatprep.subr.mxu0 0.0
      %292 = vmatpush1.msra.mxu0 0.0
      %293 = vmatprep.subr.mxu0 0.0
      %294 = vmatpush1.msra.mxu0 0.0
      %295 = vmatprep.subr.mxu0 0.0
      %296 = vmatpush1.msra.mxu0 0.0
      %297 = vmatprep.subr.mxu0 0.0
      %298 = vmatpush1.msra.mxu0 0.0
      %299 = vmatprep.subr.mxu0 0.0
      %300 = vmatpush1.msra.mxu0 0.0
      %301 = vmatprep.subr.mxu0 0.0
      %302 = vmatpush1.msra.mxu0 0.0
      %303 = vmatprep.subr.mxu0 0.0
      %304 = vmatpush1.msra.mxu0 0.0
      %305 = vmatprep.subr.mxu0 0.0
      %306 = vmatpush1.msra.mxu0 0.0
      %307 = vmatprep.subr.mxu0 0.0
      %308 = vmatpush1.msra.mxu0 0.0
      %309 = vmatprep.subr.mxu0 0.0
      %310 = vmatpush1.msra.mxu0 0.0
      %311 = vmatprep.subr.mxu0 0.0
      %312 = vmatpush1.msra.mxu0 0.0
      %313 = vmatprep.subr.mxu0 0.0
      %314 = vmatpush1.msra.mxu0 0.0
      %315 = vmatprep.subr.mxu0 0.0
      %316 = vmatpush1.msra.mxu0 0.0
      %317 = vmatprep.subr.mxu0 0.0
      %318 = vmatpush1.msra.mxu0 0.0
      %319 = vmatprep.subr.mxu0 0.0
      %320 = vmatpush1.msra.mxu0 0.0
      %321 = vmatprep.subr.mxu0 0.0
      %322 = vmatpush1.msra.mxu0 0.0
      %323 = vmatprep.subr.mxu0 0.0
      %324 = vmatpush1.msra.mxu0 0.0
      %325 = vmatprep.subr.mxu0 0.0
      %326 = vmatpush1.msra.mxu0 0.0
      %327 = vmatprep.subr.mxu0 0.0
      %328 = vmatpush1.msra.mxu0 0.0
      %329 = vmatprep.subr.mxu0 0.0
      %330 = vmatpush1.msra.mxu0 0.0
      %331 = vmatprep.subr.mxu0 0.0
      %332 = vmatpush1.msra.mxu0 0.0
      %333 = vmatprep.subr.mxu0 0.0
      %334 = vmatpush1.msra.mxu0 0.0
      %335 = vmatprep.subr.mxu0 0.0
      %336 = vmatpush1.msra.mxu0 0.0
      %337 = vmatprep.subr.mxu0 0.0
      %338 = vmatpush1.msra.mxu0 0.0
      %339 = vmatprep.subr.mxu0 0.0
      %340 = vmatpush1.msra.mxu0 0.0
      %341 = vmatprep.subr.mxu0 0.0
      %342 = vmatpush1.msra.mxu0 0.0
      %343 = vmatprep.subr.mxu0 0.0
      %344 = vmatpush1.msra.mxu0 0.0
      %345 = vmatprep.subr.mxu0 0.0
      %346 = vmatpush1.msra.mxu0 0.0
      %347 = vmatprep.subr.mxu0 0.0
      %348 = vmatpush1.msra.mxu0 0.0
      %349 = vmatprep.subr.mxu0 0.0
      %350 = vmatpush1.msra.mxu0 0.0
      %351 = vmatprep.subr.mxu0 0.0
      %352 = vmatpush1.msra.mxu0 0.0
      %353 = vmatprep.mubr.f32.mxu0 0.0
      %354 = vmatmul.mubr.f32.gmra.mrb[0].mxu0 %v282
      %v355 = vpop.f32.mrb[0].mxu0
      %v356 = vadd.f32 %v271, %v355
      %v357 = vpop.f32.mrb[0].mxu0
      %v358 = vadd.f32 %v275, %v357
      %359 = vdwg.mxu0
      %v360 = vtanh.pop %v356
      %v361 = vtanh.pop %v358
      %v362 = vld [vmem:[%s2] sm:$0xff]
      %v363 = vld [vmem:[%s2 + $0x8] sm:$0xff]
      %v364 = vld [vmem:[%s2 + $0x10] sm:$0xff]
      %v365 = vld [vmem:[%s2 + $0x18] sm:$0xff]
      %v366 = vld [vmem:[%s2 + $0x20] sm:$0xff]
      %v367 = vld [vmem:[%s2 + $0x28] sm:$0xff]
      %v368 = vld [vmem:[%s2 + $0x30] sm:$0xff]
      %v369 = vld [vmem:[%s2 + $0x38] sm:$0xff]
      %v370 = vld [vmem:[%s2 + $0x40] sm:$0xff]
      %v371 = vld [vmem:[%s2 + $0x48] sm:$0xff]
      %v372 = vld [vmem:[%s2 + $0x50] sm:$0xff]
      %v373 = vld [vmem:[%s2 + $0x58] sm:$0xff]
      %v374 = vld [vmem:[%s2 + $0x60] sm:$0xff]
      %v375 = vld [vmem:[%s2 + $0x68] sm:$0xff]
      %v376 = vld [vmem:[%s2 + $0x70] sm:$0xff]
      %v377 = vld [vmem:[%s2 + $0x78] sm:$0xff]
      %v378 = vld [vmem:[%s5 + $0x1] sm:$0x1]
      %v379 = vlaneseq
      %v380 = vshrl.u32 %v379, 7
      %v381 = vsub.s32 0, %v380
      %v382 = vrot.slane %v378, %v381
      %383 = vmatprep.subr.mxu0 0.0
      %384 = vmatpush1.msra.mxu0 %v362
      %385 = vmatprep.subr.mxu0 0.0
      %386 = vmatpush1.msra.mxu0 %v363
      %387 = vmatprep.subr.mxu0 0.0
      %388 = vmatpush1.msra.mxu0 %v364
      %389 = vmatprep.subr.mxu0 0.0
      %390 = vmatpush1.msra.mxu0 %v365
      %391 = vmatprep.subr.mxu0 0.0
      %392 = vmatpush1.msra.mxu0 %v366
      %393 = vmatprep.subr.mxu0 0.0
      %394 = vmatpush1.msra.mxu0 %v367
      %395 = vmatprep.subr.mxu0 0.0
      %396 = vmatpush1.msra.mxu0 %v368
      %397 = vmatprep.subr.mxu0 0.0
      %398 = vmatpush1.msra.mxu0 %v369
      %399 = vmatprep.subr.mxu0 0.0
      %400 = vmatpush1.msra.mxu0 %v370
      %401 = vmatprep.subr.mxu0 0.0
      %402 = vmatpush1.msra.mxu0 %v371
      %403 = vmatprep.subr.mxu0 0.0
      %404 = vmatpush1.msra.mxu0 %v372
      %405 = vmatprep.subr.mxu0 0.0
      %406 = vmatpush1.msra.mxu0 %v373
      %407 = vmatprep.subr.mxu0 0.0
      %408 = vmatpush1.msra.mxu0 %v374
      %409 = vmatprep.subr.mxu0 0.0
      %410 = vmatpush1.msra.mxu0 %v375
      %411 = vmatprep.subr.mxu0 0.0
      %412 = vmatpush1.msra.mxu0 %v376
      %413 = vmatprep.subr.mxu0 0.0
      %414 = vmatpush1.msra.mxu0 %v377
      %415 = vmatprep.subr.mxu0 0.0
      %416 = vmatpush1.msra.mxu0 0.0
      %417 = vmatprep.subr.mxu0 0.0
      %418 = vmatpush1.msra.mxu0 0.0
      %419 = vmatprep.subr.mxu0 0.0
      %420 = vmatpush1.msra.mxu0 0.0
      %421 = vmatprep.subr.mxu0 0.0
      %422 = vmatpush1.msra.mxu0 0.0
      %423 = vmatprep.subr.mxu0 0.0
      %424 = vmatpush1.msra.mxu0 0.0
      %425 = vmatprep.subr.mxu0 0.0
      %426 = vmatpush1.msra.mxu0 0.0
      %427 = vmatprep.subr.mxu0 0.0
      %428 = vmatpush1.msra.mxu0 0.0
      %429 = vmatprep.subr.mxu0 0.0
      %430 = vmatpush1.msra.mxu0 0.0
      %431 = vmatprep.subr.mxu0 0.0
      %432 = vmatpush1.msra.mxu0 0.0
      %433 = vmatprep.subr.mxu0 0.0
      %434 = vmatpush1.msra.mxu0 0.0
      %435 = vmatprep.subr.mxu0 0.0
      %436 = vmatpush1.msra.mxu0 0.0
      %437 = vmatprep.subr.mxu0 0.0
      %438 = vmatpush1.msra.mxu0 0.0
      %439 = vmatprep.subr.mxu0 0.0
      %440 = vmatpush1.msra.mxu0 0.0
      %441 = vmatprep.subr.mxu0 0.0
      %442 = vmatpush1.msra.mxu0 0.0
      %443 = vmatprep.subr.mxu0 0.0
      %444 = vmatpush1.msra.mxu0 0.0
      %445 = vmatprep.subr.mxu0 0.0
      %446 = vmatpush1.msra.mxu0 0.0
      %447 = vmatprep.mubr.f32.mxu0 0.0
      %448 = vmatmul.mubr.f32.gmra.mrb[0].mxu0 %v360
      %v449 = vpop.f32.mrb[0].mxu0
      %v450 = vadd.f32 %v382, %v449
      %v451 = vpop.f32.mrb[0].mxu0
      %452 = vdwg.mxu0
      %v453 = vtanh.pop %v450
      %v454 = vld [vmem:[%s3] sm:$0xff]
      %v455 = vld [vmem:[%s3 + $0x8] sm:$0xff]
      %v456 = vld [vmem:[%s3 + $0x10] sm:$0xff]
      %v457 = vld [vmem:[%s3 + $0x18] sm:$0xff]
      %v458 = vld [vmem:[%s3 + $0x20] sm:$0xff]
      %v459 = vld [vmem:[%s3 + $0x28] sm:$0xff]
      %v460 = vld [vmem:[%s3 + $0x30] sm:$0xff]
      %v461 = vld [vmem:[%s3 + $0x38] sm:$0xff]
      %v462 = vld [vmem:[%s5 + $0x2] sm:$0x1]
      %v463 = vlaneseq
      %v464 = vshrl.u32 %v463, 7
      %v465 = vsub.s32 0, %v464
      %v466 = vrot.slane %v462, %v465
      %vm467 = vcmask 523264
      %v469 = vsel %vm467, %v453, 0
      %471 = vmatprep.subr.mxu0 0.0
      %472 = vmatpush1.msra.mxu0 %v454
      %473 = vmatprep.subr.mxu0 0.0
      %474 = vmatpush1.msra.mxu0 %v455
      %475 = vmatprep.subr.mxu0 0.0
      %476 = vmatpush1.msra.mxu0 %v456
      %477 = vmatprep.subr.mxu0 0.0
      %478 = vmatpush1.msra.mxu0 %v457
      %479 = vmatprep.subr.mxu0 0.0
      %480 = vmatpush1.msra.mxu0 %v458
      %481 = vmatprep.subr.mxu0 0.0
      %482 = vmatpush1.msra.mxu0 %v459
      %483 = vmatprep.subr.mxu0 0.0
      %484 = vmatpush1.msra.mxu0 %v460
      %485 = vmatprep.subr.mxu0 0.0
      %486 = vmatpush1.msra.mxu0 %v461
      %487 = vmatprep.subr.mxu0 0.0
      %488 = vmatpush1.msra.mxu0 0.0
      %489 = vmatprep.subr.mxu0 0.0
      %490 = vmatpush1.msra.mxu0 0.0
      %491 = vmatprep.subr.mxu0 0.0
      %492 = vmatpush1.msra.mxu0 0.0
      %493 = vmatprep.subr.mxu0 0.0
      %494 = vmatpush1.msra.mxu0 0.0
      %495 = vmatprep.subr.mxu0 0.0
      %496 = vmatpush1.msra.mxu0 0.0
      %497 = vmatprep.subr.mxu0 0.0
      %498 = vmatpush1.msra.mxu0 0.0
      %499 = vmatprep.subr.mxu0 0.0
      %500 = vmatpush1.msra.mxu0 0.0
      %501 = vmatprep.subr.mxu0 0.0
      %502 = vmatpush1.msra.mxu0 0.0
      %503 = vmatprep.subr.mxu0 0.0
      %504 = vmatpush1.msra.mxu0 0.0
      %505 = vmatprep.subr.mxu0 0.0
      %506 = vmatpush1.msra.mxu0 0.0
      %507 = vmatprep.subr.mxu0 0.0
      %508 = vmatpush1.msra.mxu0 0.0
      %509 = vmatprep.subr.mxu0 0.0
      %510 = vmatpush1.msra.mxu0 0.0
      %511 = vmatprep.subr.mxu0 0.0
      %512 = vmatpush1.msra.mxu0 0.0
      %513 = vmatprep.subr.mxu0 0.0
      %514 = vmatpush1.msra.mxu0 0.0
      %515 = vmatprep.subr.mxu0 0.0
      %516 = vmatpush1.msra.mxu0 0.0
      %517 = vmatprep.subr.mxu0 0.0
      %518 = vmatpush1.msra.mxu0 0.0
      %519 = vmatprep.subr.mxu0 0.0
      %520 = vmatpush1.msra.mxu0 0.0
      %521 = vmatprep.subr.mxu0 0.0
      %522 = vmatpush1.msra.mxu0 0.0
      %523 = vmatprep.subr.mxu0 0.0
      %524 = vmatpush1.msra.mxu0 0.0
      %525 = vmatprep.subr.mxu0 0.0
      %526 = vmatpush1.msra.mxu0 0.0
      %527 = vmatprep.subr.mxu0 0.0
      %528 = vmatpush1.msra.mxu0 0.0
      %529 = vmatprep.subr.mxu0 0.0
      %530 = vmatpush1.msra.mxu0 0.0
      %531 = vmatprep.subr.mxu0 0.0
      %532 = vmatpush1.msra.mxu0 0.0
      %533 = vmatprep.subr.mxu0 0.0
      %534 = vmatpush1.msra.mxu0 0.0
      %535 = vmatprep.mubr.f32.mxu0 0.0
      %536 = vmatmul.mubr.f32.gmra.mrb[0].mxu0 %v469
      %v537 = vpop.f32.mrb[0].mxu0
      %v538 = vadd.f32 %v466, %v537
      %v539 = vpop.f32.mrb[0].mxu0
      %540 = vdwg.mxu0
      %v541 = vld [vmem:[%s4] sm:$0x1]
      %v543 = vlaneseq
      %v544 = vshrl.u32 %v543, 7
      %v545 = vsub.s32 0, %v544
      %v546 = vrot.slane %v541, %v545
      %v548 = vmul.f32 %v361, %v546
      %v549 = vsel %vm467, %v548, 0.0
      %550 = vadd.xlane.f32.xlu0 %v549
      %v551 = vpop.xlane.xlu0 %550
      %v552 = vld [vmem:[%s5 + $0x3] sm:$0x1]
      %v553 = vlaneseq
      %v554 = vshrl.u32 %v553, 7
      %v555 = vsub.s32 0, %v554
      %v556 = vrot.slane %v552, %v555
      %v557 = vadd.f32 %v551, %v556
      %p558 = scmp.eq.s32.totalorder %s21, 0
      // Predicated region
      $region45: #{tpu_custom_call.1} parent=43 // pred_check
        %p559 = pneg %p558
      $region46: #{tpu_custom_call.1} parent=43 // pred_check_branch
        %561 = sbr.rel (%p559) target = $region48
      $region47: #{tpu_custom_call.1} parent=43 // pred_region
        %p562 = scmp.eq.s32.totalorder %s22, 0
        // Predicated region
        $region49: #{tpu_custom_call.1} parent=47 // pred_check
          %p563 = pneg %p562
        $region50: #{tpu_custom_call.1} parent=47 // pred_check_branch
          %565 = sbr.rel (%p563) target = $region52
        $region51: #{tpu_custom_call.1} parent=47 // pred_region
          %vm566 = vcmask 0
          %567 = vst.msk [vmem:[#allocation2] sm:$0x1] %vm566, 0.0
        $region52: #{tpu_custom_call.1} parent=47 // pred_fallthru
          _
        %v568 = vld [vmem:[#allocation2] sm:$0x1]
        %vm569 = vcmask 31744
        %v570 = vsel %vm569, %v538, 0.0
        %571 = vadd.xlane.f32.xlu0 %v570
        %v572 = vpop.xlane.xlu0 %571
        %v573 = vrot.slane %v572, 4
        %v574 = vadd.f32 %v572, %v573
        %v575 = vrot.slane %v574, 2
        %v576 = vadd.f32 %v574, %v575
        %v577 = vrot.slane %v576, 1
        %v578 = vadd.f32 %v576, %v577
        %s579 = vtos %v578
        %v580 = vstv %s579
        %v581 = vadd.f32 %v568, %v580
        %vm582 = vcmask 0
        %583 = vst.msk [vmem:[#allocation2] sm:$0x1] %vm582, %v581
      $region48: #{tpu_custom_call.1} parent=43 // pred_fallthru
        _
      %p584 = scmp.eq.s32.totalorder %s21, 1
      // Predicated region
      $region53: #{tpu_custom_call.1} parent=43 // pred_check
        %p585 = pneg %p584
      $region54: #{tpu_custom_call.1} parent=43 // pred_check_branch
        %587 = sbr.rel (%p585) target = $region56
      $region55: #{tpu_custom_call.1} parent=43 // pred_region
        %v588 = vld [vmem:[#allocation2] sm:$0x1]
        %v589 = vmul.f32 %v588, 0.03125
        %591 = vset.pattern.permute.xlu0 0
        %592 = vperm.xlu0 %591, %v557
        %v593 = vpop.permute.xlu0 %592
        %v595 = vadd.f32 %v538, %v593
        %v597 = vlaneseq
        %v598 = vshrl.u32 %v597, 7
        %v599 = vsub.s32 0, %v598
        %v600 = vrot.slane %v589, %v599
        %601 = vset.pattern.permute.xlu0 0
        %602 = vperm.xlu0 %601, %v600
        %v603 = vpop.permute.xlu0 %602
        %v605 = vsub.f32 %v595, %v603
        %vm606 = vcmask 31744
        %607 = vst.msk [vmem:[%s262] sm:$0xff] %vm606, %v605
      $region56: #{tpu_custom_call.1} parent=43 // pred_fallthru
        _
      %s608 = smul.u32 %s22, %s21
      %p609 = scmp.lt.s32.totalorder %s608, 0
      %s610 = scalar_select %p609, %s608, 0
      %s611 = smul.addr %s610, 8
      %s612 = scalar_lea.vmem %s6, %s611
      // Predicated region
      $region57: #{tpu_custom_call.1} parent=43 // pred_check
        %p613 = pneg %p180
      $region58: #{tpu_custom_call.1} parent=43 // pred_check_branch
        %615 = sbr.rel (%p613) target = $region60
      $region59: #{tpu_custom_call.1} parent=43 // pred_region
        %s616 = smul.u32 %s22, %s21
      $region60: #{tpu_custom_call.1} parent=43 // pred_fallthru
        _
    $region44: #{tpu_custom_call.1} parent=5 // pred_fallthru
      _
    %p617 = scmp.le.s32.totalorder 2, %s12
    // Predicated region
    $region61: #{tpu_custom_call.1} parent=5 // pred_check
      %p618 = pneg %p617
    $region62: #{tpu_custom_call.1} parent=5 // pred_check_branch
      %620 = sbr.rel (%p618) target = $region64
    $region63: #{tpu_custom_call.1} parent=5 // pred_region
      %s621 = ssub.s32 %s12, 2
      // Predicated region
      $region65: #{tpu_custom_call.1} parent=63 // pred_check
        %p622 = pneg %p186
      $region66: #{tpu_custom_call.1} parent=63 // pred_check_branch
        %624 = sbr.rel (%p622) target = $region68
      $region67: #{tpu_custom_call.1} parent=63 // pred_region
        %s625 = smul.u32 %s24, %s23
        %p626 = scmp.lt.s32.totalorder %s625, 0
        %s627 = scalar_select %p626, %s625, 0
        %s628 = smul.addr %s627, 8
        %s629 = scalar_lea.vmem %s6, %s628
      $region68: #{tpu_custom_call.1} parent=63 // pred_fallthru
        _
    $region64: #{tpu_custom_call.1} parent=5 // pred_fallthru
      _
  $region6: #{tpu_custom_call.1} parent=0 // loop_footer
    %s16 = sadd.s32 1, %s12
  $region7: #{tpu_custom_call.1} parent=0 // loop_footer_branch
    %11 = sbr.rel target = $region3
  $region8: #{tpu_custom_call.1} parent=0 // loop_exit
    _

</llo_original>
